<compile_context>
chip_gen: v7x
topology: tpu7x:2x2x1
jax: 0.10.0
libtpu: 0.0.40
codegen_flags: <defaults>
</compile_context>

<pallas_src>
from functools import partial

import jax
import jax.numpy as jnp
from jax.experimental import pallas as pl
from jax.experimental.pallas import tpu as pltpu

ALPHA = 0.2  # leaky relu negative slope


def _leaky(z):
    # Valid for 0 < ALPHA < 1: max(z, a*z) == leaky_relu(z).  One mul + one max.
    return jnp.maximum(z, ALPHA * z)


def mp_layer_kernel(x_ref,
                    wfe1a_ref, wfe1b_ref, bfe1_ref,
                    wfe2_ref, bfe2_ref,
                    wfn1m_ref, wfn1x_ref, bfn1_ref,
                    wfn2_ref, bfn2_ref,
                    out_ref, *, batch_block, num_nodes):
    """One grid step = Bt batch elements.  Everything lives in VMEM."""
    Bt = batch_block
    N = num_nodes

    x = x_ref[...]                                   # (Bt, N, F)
    F_ = x.shape[-1]
    xf = x.reshape(Bt * N, F_)                       # leading-dim collapse (layout-free)

    # ---- edge network fe, layer 1 -----------------------------------------
    # A[i*N+j] = concat(x[i], x[j])  =>  A @ Wfe1 = x[i] @ W1a + x[j] @ W1b
    u = jnp.dot(xf, wfe1a_ref[...], preferred_element_type=jnp.float32) + bfe1_ref[...]
    v = jnp.dot(xf, wfe1b_ref[...], preferred_element_type=jnp.float32)
    H1 = u.shape[-1]
    u = u.reshape(Bt, N, H1)                         # sender part   (bias folded in once)
    v = v.reshape(Bt, N, H1)                         # receiver part
    h1 = _leaky(u[:, :, None, :] + v[:, None, :, :])  # (Bt, N, N, H1), one broadcast add

    # ---- edge network fe, layer 2 (final_linear=False => activation) -------
    h1f = h1.reshape(Bt * N * N, H1)                 # leading-dim collapse
    h2 = _leaky(jnp.dot(h1f, wfe2_ref[...], preferred_element_type=jnp.float32)
                + bfe2_ref[...])                     # (Bt*N*N, H2)
    H2 = h2.shape[-1]

    # ---- message aggregation: sum over receiver index j ---------------------
    msg = jnp.sum(h2.reshape(Bt * N, N, H2), axis=1)  # (Bt*N, H2), one sublane-reduce pass

    # ---- node network fn -----------------------------------------------------
    # concat([msg, x]) @ Wfn1 == msg @ Wfn1[:H2] + x @ Wfn1[H2:]  (no lane concat)
    g1 = _leaky(jnp.dot(msg, wfn1m_ref[...], preferred_element_type=jnp.float32)
                + jnp.dot(xf, wfn1x_ref[...], preferred_element_type=jnp.float32)
                + bfn1_ref[...])                     # (Bt*N, HN)
    g2 = (jnp.dot(g1, wfn2_ref[...], preferred_element_type=jnp.float32)
          + bfn2_ref[...])                           # (Bt*N, OUT), final_linear

    OUT = g2.shape[-1]
    out_ref[...] = g2.reshape(Bt, N, OUT).astype(out_ref.dtype)


def _pick_batch_block(B, N, F, H1, H2, HN, OUT, budget_bytes=16 << 20):
    """Largest batch block whose f32 working set stays under `budget_bytes`.

    The budget is conservative enough for v7x (64 MiB physical VMEM, 48 MiB
    scoped limit requested below); v5e/v6e have more headroom but the same Bt
    already fully amortizes per-step overhead for realistic shapes.  When a
    divisor of B fits under the budget we use it so every grid step is a
    full (unmasked) block.
    """
    per_elem = 4 * (N * N * (H1 + H2)                     # h1 / h2 (dominant)
                    + N * (F + 2 * H1 + H2 + HN + OUT))   # x, u, v, msg, g1, g2
    bt = int(max(1, budget_bytes // max(per_elem, 1)))
    bt = int(min(bt, B, 512))
    # Prefer the largest divisor of B that is <= bt (keeps blocks exact).
    for cand in range(bt, 0, -1):
        if B % cand == 0:
            return cand
    return bt


def mp_layer(x, params):
    """Pallas wrapper.  x: (B, N, F) float32."""
    B, N, F = x.shape
    wfe1, bfe1, wfe2, bfe2, wfn1, bfn1, wfn2, bfn2 = params
    H1 = wfe1.shape[1]
    H2 = wfe2.shape[1]
    HN = wfn1.shape[1]
    OUT = wfn2.shape[1]

    # Plain-JAX glue: split first fe weight column-wise (sender / receiver)
    # and first fn weight row-wise (message / skip-connection input).
    wfe1a, wfe1b = wfe1[:F, :], wfe1[F:, :]
    wfn1m, wfn1x = wfn1[:H2, :], wfn1[H2:, :]

    Bt = _pick_batch_block(B, N, F, H1, H2, HN, OUT)
    grid = (pl.cdiv(B, Bt),)

    def _full_spec(a):
        nd = a.ndim
        return pl.BlockSpec(a.shape, lambda b, _nd=nd: (0,) * _nd)

    grid_spec = pltpu.PrefetchScalarGridSpec(
        num_scalar_prefetch=0,
        grid=grid,
        in_specs=[
            pl.BlockSpec((Bt, N, F), lambda b: (b, 0, 0)),
            _full_spec(wfe1a), _full_spec(wfe1b), _full_spec(bfe1),
            _full_spec(wfe2), _full_spec(bfe2),
            _full_spec(wfn1m), _full_spec(wfn1x), _full_spec(bfn1),
            _full_spec(wfn2), _full_spec(bfn2),
        ],
        out_specs=pl.BlockSpec((Bt, N, OUT), lambda b: (b, 0, 0)),
    )

    weight_elems = sum(int(w.size) for w in
                       (wfe1, bfe1, wfe2, bfe2, wfn1, bfn1, wfn2, bfn2))
    cost = pl.CostEstimate(
        flops=2 * B * N * N * (2 * F * H1 + H1 * H2)
              + 2 * B * N * ((H2 + F) * HN + HN * OUT),
        transcendentals=0,
        bytes_accessed=4 * (int(x.size) + B * N * OUT + weight_elems),
    )

    return pl.pallas_call(
        partial(mp_layer_kernel, batch_block=Bt, num_nodes=N),
        out_shape=jax.ShapeDtypeStruct((B, N, OUT), jnp.float32),
        grid_spec=grid_spec,
        compiler_params=pltpu.CompilerParams(
            dimension_semantics=("parallel",),      # batch blocks independent
            vmem_limit_bytes=48 << 20,              # > default scoped, < v7x physical
        ),
        cost_estimate=cost,
    )(x, wfe1a, wfe1b, bfe1, wfe2, bfe2, wfn1m, wfn1x, bfn1, wfn2, bfn2)


def mp_layer_ref(x, params):
    """Pure-JAX reference mirroring the PyTorch forward exactly."""
    wfe1, bfe1, wfe2, bfe2, wfn1, bfn1, wfn2, bfn2 = params
    B, N, F = x.shape

    def leaky(z):
        return jnp.where(z >= 0, z, ALPHA * z)

    # x.repeat(1,1,N).view(B, N*N, F):  x1[b, i*N+j] = x[b, i]
    x1 = jnp.repeat(x, N, axis=1)
    # x.repeat(1,N,1):                  x2[b, i*N+j] = x[b, j]
    x2 = jnp.tile(x, (1, N, 1))
    A = jnp.concatenate([x1, x2], axis=-1).reshape(B * N * N, 2 * F)
    A = leaky(A @ wfe1 + bfe1)
    A = leaky(A @ wfe2 + bfe2)
    A = A.reshape(B, N, N, -1).sum(axis=2)                      # sum aggregation
    y = jnp.concatenate([A, x], axis=2).reshape(B * N, -1)
    y = leaky(y @ wfn1 + bfn1)
    y = y @ wfn2 + bfn2                                         # final_linear
    return y.reshape(B, N, -1)


if __name__ == "__main__":
    B, N, F = 2, 8, 4              # batch, num_nodes, input_node_size
    fe_layers = [32, 16]
    fn_layers = [32]
    output_node_size = 6
    fe_in = 2 * F                  # pos_diffs=False -> num_ef = 0
    fn_in = fe_layers[-1] + F

    key = jax.random.PRNGKey(0)
    keys = jax.random.split(key, 9)

    def init(k, shape):
        return jax.random.normal(k, shape, dtype=jnp.float32) * 0.1

    x = jax.random.normal(keys[0], (B, N, F), dtype=jnp.float32)
    wfe1 = init(keys[1], (fe_in, fe_layers[0]))
    bfe1 = init(keys[2], (1, fe_layers[0]))
    wfe2 = init(keys[3], (fe_layers[0], fe_layers[1]))
    bfe2 = init(keys[4], (1, fe_layers[1]))
    wfn1 = init(keys[5], (fn_in, fn_layers[0]))
    bfn1 = init(keys[6], (1, fn_layers[0]))
    wfn2 = init(keys[7], (fn_layers[0], output_node_size))
    bfn2 = init(keys[8], (1, output_node_size))
    params = (wfe1, bfe1, wfe2, bfe2, wfn1, bfn1, wfn2, bfn2)

    out = jax.block_until_ready(mp_layer(x, params))
    ref = mp_layer_ref(x, params)

    assert out.shape == (B, N, output_node_size), out.shape
    assert jnp.allclose(out, ref, atol=1e-4, rtol=1e-4), float(jnp.max(jnp.abs(out - ref)))
    print("KERNEL_OK")
</pallas_src>

<mosaic_0001>
module attributes {stable_mosaic.version = 11 : i64} {
  func.func @mp_layer_kernel(%arg0: i32, %arg1: memref<2x8x4xf32, #tpu.memory_space<vmem>>, %arg2: memref<4x32xf32, #tpu.memory_space<vmem>>, %arg3: memref<4x32xf32, #tpu.memory_space<vmem>>, %arg4: memref<1x32xf32, #tpu.memory_space<vmem>>, %arg5: memref<32x16xf32, #tpu.memory_space<vmem>>, %arg6: memref<1x16xf32, #tpu.memory_space<vmem>>, %arg7: memref<16x32xf32, #tpu.memory_space<vmem>>, %arg8: memref<4x32xf32, #tpu.memory_space<vmem>>, %arg9: memref<1x32xf32, #tpu.memory_space<vmem>>, %arg10: memref<32x6xf32, #tpu.memory_space<vmem>>, %arg11: memref<1x6xf32, #tpu.memory_space<vmem>>, %arg12: memref<2x8x6xf32, #tpu.memory_space<vmem>>) attributes {dimension_semantics = [#tpu.dimension_semantics<parallel>], iteration_bounds = array<i64: 1>, scalar_prefetch = 0 : i64, scratch_operands = 0 : i64, tpu.core_type = #tpu.core_type<tc>, window_params = [{transform_indices = @transform_0, window_bounds = array<i64: 2, 8, 4>}, {pipeline_mode = #tpu.pipeline_mode<synchronous>, transform_indices = @transform_1, window_bounds = array<i64: 4, 32>}, {pipeline_mode = #tpu.pipeline_mode<synchronous>, transform_indices = @transform_2, window_bounds = array<i64: 4, 32>}, {pipeline_mode = #tpu.pipeline_mode<synchronous>, transform_indices = @transform_3, window_bounds = array<i64: 1, 32>}, {pipeline_mode = #tpu.pipeline_mode<synchronous>, transform_indices = @transform_4, window_bounds = array<i64: 32, 16>}, {pipeline_mode = #tpu.pipeline_mode<synchronous>, transform_indices = @transform_5, window_bounds = array<i64: 1, 16>}, {pipeline_mode = #tpu.pipeline_mode<synchronous>, transform_indices = @transform_6, window_bounds = array<i64: 16, 32>}, {pipeline_mode = #tpu.pipeline_mode<synchronous>, transform_indices = @transform_7, window_bounds = array<i64: 4, 32>}, {pipeline_mode = #tpu.pipeline_mode<synchronous>, transform_indices = @transform_8, window_bounds = array<i64: 1, 32>}, {pipeline_mode = #tpu.pipeline_mode<synchronous>, transform_indices = @transform_9, window_bounds = array<i64: 32, 6>}, {pipeline_mode = #tpu.pipeline_mode<synchronous>, transform_indices = @transform_10, window_bounds = array<i64: 1, 6>}, {transform_indices = @transform_11, window_bounds = array<i64: 2, 8, 6>}]} {
    %c0 = arith.constant 0 : index
    %c0_0 = arith.constant 0 : index
    %c0_1 = arith.constant 0 : index
    %0 = vector.load %arg1[%c0, %c0_0, %c0_1] : memref<2x8x4xf32, #tpu.memory_space<vmem>>, vector<2x8x4xf32>
    %1 = vector.shape_cast %0 : vector<2x8x4xf32> to vector<16x4xf32>
    %c0_2 = arith.constant 0 : index
    %c0_3 = arith.constant 0 : index
    %2 = vector.load %arg2[%c0_2, %c0_3] : memref<4x32xf32, #tpu.memory_space<vmem>>, vector<4x32xf32>
    %cst = arith.constant dense<0.000000e+00> : vector<16x32xf32>
    %3 = tpu.matmul %1, %2, %cst {dimension_numbers = #tpu.dot_dimension_numbers<[1], [0], [0], [1], [0, 0, 1, 1], [], []>} : vector<16x4xf32>, vector<4x32xf32>, vector<16x32xf32> -> vector<16x32xf32>
    %c0_4 = arith.constant 0 : index
    %c0_5 = arith.constant 0 : index
    %4 = vector.load %arg4[%c0_4, %c0_5] : memref<1x32xf32, #tpu.memory_space<vmem>>, vector<1x32xf32>
    %5 = vector.broadcast %4 : vector<1x32xf32> to vector<16x32xf32>
    %6 = arith.addf %3, %5 : vector<16x32xf32>
    %c0_6 = arith.constant 0 : index
    %c0_7 = arith.constant 0 : index
    %7 = vector.load %arg3[%c0_6, %c0_7] : memref<4x32xf32, #tpu.memory_space<vmem>>, vector<4x32xf32>
    %cst_8 = arith.constant dense<0.000000e+00> : vector<16x32xf32>
    %8 = tpu.matmul %1, %7, %cst_8 {dimension_numbers = #tpu.dot_dimension_numbers<[1], [0], [0], [1], [0, 0, 1, 1], [], []>} : vector<16x4xf32>, vector<4x32xf32>, vector<16x32xf32> -> vector<16x32xf32>
    %9 = vector.shape_cast %6 : vector<16x32xf32> to vector<2x8x32xf32>
    %10 = vector.shape_cast %8 : vector<16x32xf32> to vector<2x8x32xf32>
    %11 = vector.shape_cast %9 : vector<2x8x32xf32> to vector<2x8x1x32xf32>
    %12 = vector.shape_cast %10 : vector<2x8x32xf32> to vector<2x1x8x32xf32>
    %13 = vector.broadcast %11 : vector<2x8x1x32xf32> to vector<2x8x8x32xf32>
    %14 = vector.broadcast %12 : vector<2x1x8x32xf32> to vector<2x8x8x32xf32>
    %15 = arith.addf %13, %14 : vector<2x8x8x32xf32>
    %cst_9 = arith.constant 2.000000e-01 : f32
    %16 = vector.broadcast %cst_9 : f32 to vector<2x8x8x32xf32>
    %17 = arith.mulf %16, %15 : vector<2x8x8x32xf32>
    %18 = arith.maximumf %15, %17 : vector<2x8x8x32xf32>
    %19 = vector.shape_cast %18 : vector<2x8x8x32xf32> to vector<128x32xf32>
    %c0_10 = arith.constant 0 : index
    %c0_11 = arith.constant 0 : index
    %20 = vector.load %arg5[%c0_10, %c0_11] : memref<32x16xf32, #tpu.memory_space<vmem>>, vector<32x16xf32>
    %cst_12 = arith.constant dense<0.000000e+00> : vector<128x16xf32>
    %21 = tpu.matmul %19, %20, %cst_12 {dimension_numbers = #tpu.dot_dimension_numbers<[1], [0], [0], [1], [0, 0, 1, 1], [], []>} : vector<128x32xf32>, vector<32x16xf32>, vector<128x16xf32> -> vector<128x16xf32>
    %c0_13 = arith.constant 0 : index
    %c0_14 = arith.constant 0 : index
    %22 = vector.load %arg6[%c0_13, %c0_14] : memref<1x16xf32, #tpu.memory_space<vmem>>, vector<1x16xf32>
    %23 = vector.broadcast %22 : vector<1x16xf32> to vector<128x16xf32>
    %24 = arith.addf %21, %23 : vector<128x16xf32>
    %cst_15 = arith.constant 2.000000e-01 : f32
    %25 = vector.broadcast %cst_15 : f32 to vector<128x16xf32>
    %26 = arith.mulf %25, %24 : vector<128x16xf32>
    %27 = arith.maximumf %24, %26 : vector<128x16xf32>
    %28 = vector.shape_cast %27 : vector<128x16xf32> to vector<16x8x16xf32>
    %cst_16 = arith.constant dense<0.000000e+00> : vector<16x16xf32>
    %29 = vector.multi_reduction <add>, %28, %cst_16 [1] : vector<16x8x16xf32> to vector<16x16xf32>
    %c0_17 = arith.constant 0 : index
    %c0_18 = arith.constant 0 : index
    %30 = vector.load %arg7[%c0_17, %c0_18] : memref<16x32xf32, #tpu.memory_space<vmem>>, vector<16x32xf32>
    %cst_19 = arith.constant dense<0.000000e+00> : vector<16x32xf32>
    %31 = tpu.matmul %29, %30, %cst_19 {dimension_numbers = #tpu.dot_dimension_numbers<[1], [0], [0], [1], [0, 0, 1, 1], [], []>} : vector<16x16xf32>, vector<16x32xf32>, vector<16x32xf32> -> vector<16x32xf32>
    %c0_20 = arith.constant 0 : index
    %c0_21 = arith.constant 0 : index
    %32 = vector.load %arg8[%c0_20, %c0_21] : memref<4x32xf32, #tpu.memory_space<vmem>>, vector<4x32xf32>
    %cst_22 = arith.constant dense<0.000000e+00> : vector<16x32xf32>
    %33 = tpu.matmul %1, %32, %cst_22 {dimension_numbers = #tpu.dot_dimension_numbers<[1], [0], [0], [1], [0, 0, 1, 1], [], []>} : vector<16x4xf32>, vector<4x32xf32>, vector<16x32xf32> -> vector<16x32xf32>
    %34 = arith.addf %31, %33 : vector<16x32xf32>
    %c0_23 = arith.constant 0 : index
    %c0_24 = arith.constant 0 : index
    %35 = vector.load %arg9[%c0_23, %c0_24] : memref<1x32xf32, #tpu.memory_space<vmem>>, vector<1x32xf32>
    %36 = vector.broadcast %35 : vector<1x32xf32> to vector<16x32xf32>
    %37 = arith.addf %34, %36 : vector<16x32xf32>
    %cst_25 = arith.constant 2.000000e-01 : f32
    %38 = vector.broadcast %cst_25 : f32 to vector<16x32xf32>
    %39 = arith.mulf %38, %37 : vector<16x32xf32>
    %40 = arith.maximumf %37, %39 : vector<16x32xf32>
    %c0_26 = arith.constant 0 : index
    %c0_27 = arith.constant 0 : index
    %41 = vector.load %arg10[%c0_26, %c0_27] : memref<32x6xf32, #tpu.memory_space<vmem>>, vector<32x6xf32>
    %cst_28 = arith.constant dense<0.000000e+00> : vector<16x6xf32>
    %42 = tpu.matmul %40, %41, %cst_28 {dimension_numbers = #tpu.dot_dimension_numbers<[1], [0], [0], [1], [0, 0, 1, 1], [], []>} : vector<16x32xf32>, vector<32x6xf32>, vector<16x6xf32> -> vector<16x6xf32>
    %c0_29 = arith.constant 0 : index
    %c0_30 = arith.constant 0 : index
    %43 = vector.load %arg11[%c0_29, %c0_30] : memref<1x6xf32, #tpu.memory_space<vmem>>, vector<1x6xf32>
    %44 = vector.broadcast %43 : vector<1x6xf32> to vector<16x6xf32>
    %45 = arith.addf %42, %44 : vector<16x6xf32>
    %46 = vector.shape_cast %45 : vector<16x6xf32> to vector<2x8x6xf32>
    %c0_31 = arith.constant 0 : index
    %c0_32 = arith.constant 0 : index
    %c0_33 = arith.constant 0 : index
    %47 = vector.load %arg12[%c0_31, %c0_32, %c0_33] : memref<2x8x6xf32, #tpu.memory_space<vmem>>, vector<2x8x6xf32>
    tpu.vector_store %arg12[%c0_31, %c0_32, %c0_33], %46 {strides = array<i32>} : memref<2x8x6xf32, #tpu.memory_space<vmem>>, vector<2x8x6xf32>,
    return
  }
  func.func @transform_0(%arg0: i32) -> (i32, i32, i32) {
    %c0_i32 = arith.constant 0 : i32
    %c0_i32_0 = arith.constant 0 : i32
    %c0_i32_1 = arith.constant 0 : i32
    return %arg0, %c0_i32, %c0_i32_0 : i32, i32, i32
  }
  func.func @transform_1(%arg0: i32) -> (i32, i32) {
    %c0_i32 = arith.constant 0 : i32
    %c0_i32_0 = arith.constant 0 : i32
    %c0_i32_1 = arith.constant 0 : i32
    return %c0_i32, %c0_i32_0 : i32, i32
  }
  func.func @transform_2(%arg0: i32) -> (i32, i32) {
    %c0_i32 = arith.constant 0 : i32
    %c0_i32_0 = arith.constant 0 : i32
    %c0_i32_1 = arith.constant 0 : i32
    return %c0_i32, %c0_i32_0 : i32, i32
  }
  func.func @transform_3(%arg0: i32) -> (i32, i32) {
    %c0_i32 = arith.constant 0 : i32
    %c0_i32_0 = arith.constant 0 : i32
    %c0_i32_1 = arith.constant 0 : i32
    return %c0_i32, %c0_i32_0 : i32, i32
  }
  func.func @transform_4(%arg0: i32) -> (i32, i32) {
    %c0_i32 = arith.constant 0 : i32
    %c0_i32_0 = arith.constant 0 : i32
    %c0_i32_1 = arith.constant 0 : i32
    return %c0_i32, %c0_i32_0 : i32, i32
  }
  func.func @transform_5(%arg0: i32) -> (i32, i32) {
    %c0_i32 = arith.constant 0 : i32
    %c0_i32_0 = arith.constant 0 : i32
    %c0_i32_1 = arith.constant 0 : i32
    return %c0_i32, %c0_i32_0 : i32, i32
  }
  func.func @transform_6(%arg0: i32) -> (i32, i32) {
    %c0_i32 = arith.constant 0 : i32
    %c0_i32_0 = arith.constant 0 : i32
    %c0_i32_1 = arith.constant 0 : i32
    return %c0_i32, %c0_i32_0 : i32, i32
  }
  func.func @transform_7(%arg0: i32) -> (i32, i32) {
    %c0_i32 = arith.constant 0 : i32
    %c0_i32_0 = arith.constant 0 : i32
    %c0_i32_1 = arith.constant 0 : i32
    return %c0_i32, %c0_i32_0 : i32, i32
  }
  func.func @transform_8(%arg0: i32) -> (i32, i32) {
    %c0_i32 = arith.constant 0 : i32
    %c0_i32_0 = arith.constant 0 : i32
    %c0_i32_1 = arith.constant 0 : i32
    return %c0_i32, %c0_i32_0 : i32, i32
  }
  func.func @transform_9(%arg0: i32) -> (i32, i32) {
    %c0_i32 = arith.constant 0 : i32
    %c0_i32_0 = arith.constant 0 : i32
    %c0_i32_1 = arith.constant 0 : i32
    return %c0_i32, %c0_i32_0 : i32, i32
  }
  func.func @transform_10(%arg0: i32) -> (i32, i32) {
    %c0_i32 = arith.constant 0 : i32
    %c0_i32_0 = arith.constant 0 : i32
    %c0_i32_1 = arith.constant 0 : i32
    return %c0_i32, %c0_i32_0 : i32, i32
  }
  func.func @transform_11(%arg0: i32) -> (i32, i32, i32) {
    %c0_i32 = arith.constant 0 : i32
    %c0_i32_0 = arith.constant 0 : i32
    %c0_i32_1 = arith.constant 0 : i32
    return %arg0, %c0_i32, %c0_i32_0 : i32, i32, i32
  }
}

</mosaic_0001>

<llo_original>
// kernel: tpu_custom_call.1
$region0: #{tpu_custom_call.1}
  #allocation0 [shape = 'u32[]', space=smem, size = 0x4, offset = 0x4, fixed_abs, tag = 'smem constant byte address 0x4 - core index']
  #allocation1 [shape = 'u32[144,128]{1,0:T(1,128)}', space=vmem, size = 0x12000, scoped, tag = 'internal scratch']
  %s0 = inlined_call_operand.vmem [shape: f32[2,8,4], index: 0, kind: input, shape index: {}]
  %s1 = inlined_call_operand.vmem [shape: f32[4,32], index: 1, kind: input, shape index: {}]
  %s2 = inlined_call_operand.vmem [shape: f32[4,32], index: 2, kind: input, shape index: {}]
  %s3 = inlined_call_operand.vmem [shape: f32[1,32], index: 3, kind: input, shape index: {}]
  %s4 = inlined_call_operand.vmem [shape: f32[32,16], index: 4, kind: input, shape index: {}]
  %s5 = inlined_call_operand.vmem [shape: f32[1,16], index: 5, kind: input, shape index: {}]
  %s6 = inlined_call_operand.vmem [shape: f32[16,32], index: 6, kind: input, shape index: {}]
  %s7 = inlined_call_operand.vmem [shape: f32[4,32], index: 7, kind: input, shape index: {}]
  %s8 = inlined_call_operand.vmem [shape: f32[1,32], index: 8, kind: input, shape index: {}]
  %s9 = inlined_call_operand.vmem [shape: f32[32,6], index: 9, kind: input, shape index: {}]
  %s10 = inlined_call_operand.vmem [shape: f32[1,6], index: 10, kind: input, shape index: {}]
  %s11 = inlined_call_operand.vmem [shape: f32[2,8,6], index: 11, kind: output, shape index: {}]
  %s12 = sld [smem:[#allocation0]]
  $region54: #{tpu_custom_call.1} parent=0
    _
  %s14 = ssub.s32 1, %s12
  %s15 = scalar_select 0, %s14, %s12
  // Predicated region
  $region2: #{tpu_custom_call.1} parent=0 // pred_check
    _
  $region3: #{tpu_custom_call.1} parent=0 // pred_check_branch
    %17 = sbr.rel (0) target = $region5
  $region4: #{tpu_custom_call.1} parent=0 // pred_region
    _
  $region5: #{tpu_custom_call.1} parent=0 // pred_fallthru
    _
  // Predicated region
  $region6: #{tpu_custom_call.1} parent=0 // pred_check
    _
  $region7: #{tpu_custom_call.1} parent=0 // pred_check_branch
    %19 = sbr.rel (0) target = $region9
  $region8: #{tpu_custom_call.1} parent=0 // pred_region
    _
  $region9: #{tpu_custom_call.1} parent=0 // pred_fallthru
    _
  // Predicated region
  $region10: #{tpu_custom_call.1} parent=0 // pred_check
    _
  $region11: #{tpu_custom_call.1} parent=0 // pred_check_branch
    %21 = sbr.rel (0) target = $region13
  $region12: #{tpu_custom_call.1} parent=0 // pred_region
    _
  $region13: #{tpu_custom_call.1} parent=0 // pred_fallthru
    _
  // Predicated region
  $region14: #{tpu_custom_call.1} parent=0 // pred_check
    _
  $region15: #{tpu_custom_call.1} parent=0 // pred_check_branch
    %23 = sbr.rel (0) target = $region17
  $region16: #{tpu_custom_call.1} parent=0 // pred_region
    _
  $region17: #{tpu_custom_call.1} parent=0 // pred_fallthru
    _
  // Predicated region
  $region18: #{tpu_custom_call.1} parent=0 // pred_check
    _
  $region19: #{tpu_custom_call.1} parent=0 // pred_check_branch
    %25 = sbr.rel (0) target = $region21
  $region20: #{tpu_custom_call.1} parent=0 // pred_region
    _
  $region21: #{tpu_custom_call.1} parent=0 // pred_fallthru
    _
  // Predicated region
  $region22: #{tpu_custom_call.1} parent=0 // pred_check
    _
  $region23: #{tpu_custom_call.1} parent=0 // pred_check_branch
    %27 = sbr.rel (0) target = $region25
  $region24: #{tpu_custom_call.1} parent=0 // pred_region
    _
  $region25: #{tpu_custom_call.1} parent=0 // pred_fallthru
    _
  // Predicated region
  $region26: #{tpu_custom_call.1} parent=0 // pred_check
    _
  $region27: #{tpu_custom_call.1} parent=0 // pred_check_branch
    %29 = sbr.rel (0) target = $region29
  $region28: #{tpu_custom_call.1} parent=0 // pred_region
    _
  $region29: #{tpu_custom_call.1} parent=0 // pred_fallthru
    _
  // Predicated region
  $region30: #{tpu_custom_call.1} parent=0 // pred_check
    _
  $region31: #{tpu_custom_call.1} parent=0 // pred_check_branch
    %31 = sbr.rel (0) target = $region33
  $region32: #{tpu_custom_call.1} parent=0 // pred_region
    _
  $region33: #{tpu_custom_call.1} parent=0 // pred_fallthru
    _
  // Predicated region
  $region34: #{tpu_custom_call.1} parent=0 // pred_check
    _
  $region35: #{tpu_custom_call.1} parent=0 // pred_check_branch
    %33 = sbr.rel (0) target = $region37
  $region36: #{tpu_custom_call.1} parent=0 // pred_region
    _
  $region37: #{tpu_custom_call.1} parent=0 // pred_fallthru
    _
  // Predicated region
  $region38: #{tpu_custom_call.1} parent=0 // pred_check
    _
  $region39: #{tpu_custom_call.1} parent=0 // pred_check_branch
    %35 = sbr.rel (0) target = $region41
  $region40: #{tpu_custom_call.1} parent=0 // pred_region
    _
  $region41: #{tpu_custom_call.1} parent=0 // pred_fallthru
    _
  // Predicated region
  $region42: #{tpu_custom_call.1} parent=0 // pred_check
    _
  $region43: #{tpu_custom_call.1} parent=0 // pred_check_branch
    %37 = sbr.rel (0) target = $region45
  $region44: #{tpu_custom_call.1} parent=0 // pred_region
    _
  $region45: #{tpu_custom_call.1} parent=0 // pred_fallthru
    _
  %v38 = vld [vmem:[%s0] sm:$0xff]
  %v39 = vld [vmem:[%s0 + $0x8] sm:$0xff]
  %v40 = vld [vmem:[%s1] sm:$0xf]
  %v41 = vld [vmem:[%s3] sm:$0x1]
  %v43 = vlaneseq
  %v44 = vshrl.u32 %v43, 7
  %v45 = vsub.s32 0, %v44
  %v46 = vrot.slane %v41, %v45
  %vm48 = vcmask 31744
  %v50 = vsel %vm48, %v38, 0
  %v53 = vsel %vm48, %v39, 0
  %vm55 = vcmask 1043456
  %v57 = vsel %vm55, %v40, 0
  %59 = vmatprep.subr.mxu0 0.0
  %60 = vmatpush1.msra.mxu0 %v57
  %61 = vmatprep.subr.mxu0 0.0
  %62 = vmatpush1.msra.mxu0 0.0
  %63 = vmatprep.subr.mxu0 0.0
  %64 = vmatpush1.msra.mxu0 0.0
  %65 = vmatprep.subr.mxu0 0.0
  %66 = vmatpush1.msra.mxu0 0.0
  %67 = vmatprep.subr.mxu0 0.0
  %68 = vmatpush1.msra.mxu0 0.0
  %69 = vmatprep.subr.mxu0 0.0
  %70 = vmatpush1.msra.mxu0 0.0
  %71 = vmatprep.subr.mxu0 0.0
  %72 = vmatpush1.msra.mxu0 0.0
  %73 = vmatprep.subr.mxu0 0.0
  %74 = vmatpush1.msra.mxu0 0.0
  %75 = vmatprep.subr.mxu0 0.0
  %76 = vmatpush1.msra.mxu0 0.0
  %77 = vmatprep.subr.mxu0 0.0
  %78 = vmatpush1.msra.mxu0 0.0
  %79 = vmatprep.subr.mxu0 0.0
  %80 = vmatpush1.msra.mxu0 0.0
  %81 = vmatprep.subr.mxu0 0.0
  %82 = vmatpush1.msra.mxu0 0.0
  %83 = vmatprep.subr.mxu0 0.0
  %84 = vmatpush1.msra.mxu0 0.0
  %85 = vmatprep.subr.mxu0 0.0
  %86 = vmatpush1.msra.mxu0 0.0
  %87 = vmatprep.subr.mxu0 0.0
  %88 = vmatpush1.msra.mxu0 0.0
  %89 = vmatprep.subr.mxu0 0.0
  %90 = vmatpush1.msra.mxu0 0.0
  %91 = vmatprep.subr.mxu0 0.0
  %92 = vmatpush1.msra.mxu0 0.0
  %93 = vmatprep.subr.mxu0 0.0
  %94 = vmatpush1.msra.mxu0 0.0
  %95 = vmatprep.subr.mxu0 0.0
  %96 = vmatpush1.msra.mxu0 0.0
  %97 = vmatprep.subr.mxu0 0.0
  %98 = vmatpush1.msra.mxu0 0.0
  %99 = vmatprep.subr.mxu0 0.0
  %100 = vmatpush1.msra.mxu0 0.0
  %101 = vmatprep.subr.mxu0 0.0
  %102 = vmatpush1.msra.mxu0 0.0
  %103 = vmatprep.subr.mxu0 0.0
  %104 = vmatpush1.msra.mxu0 0.0
  %105 = vmatprep.subr.mxu0 0.0
  %106 = vmatpush1.msra.mxu0 0.0
  %107 = vmatprep.subr.mxu0 0.0
  %108 = vmatpush1.msra.mxu0 0.0
  %109 = vmatprep.subr.mxu0 0.0
  %110 = vmatpush1.msra.mxu0 0.0
  %111 = vmatprep.subr.mxu0 0.0
  %112 = vmatpush1.msra.mxu0 0.0
  %113 = vmatprep.subr.mxu0 0.0
  %114 = vmatpush1.msra.mxu0 0.0
  %115 = vmatprep.subr.mxu0 0.0
  %116 = vmatpush1.msra.mxu0 0.0
  %117 = vmatprep.subr.mxu0 0.0
  %118 = vmatpush1.msra.mxu0 0.0
  %119 = vmatprep.subr.mxu0 0.0
  %120 = vmatpush1.msra.mxu0 0.0
  %121 = vmatprep.subr.mxu0 0.0
  %122 = vmatpush1.msra.mxu0 0.0
  %123 = vmatprep.mubr.f32.mxu0 0.0
  %124 = vmatmul.mubr.f32.gmra.mrb[0].mxu0 %v50
  %v125 = vpop.f32.mrb[0].mxu0
  %v126 = vadd.f32 %v46, %v125
  %v127 = vpop.f32.mrb[0].mxu0
  %128 = vmatprep.mubr.f32.mxu0 0.0
  %129 = vmatmul.mubr.f32.gmra.mrb[0].mxu0 %v53
  %v130 = vpop.f32.mrb[0].mxu0
  %v131 = vadd.f32 %v46, %v130
  %v132 = vpop.f32.mrb[0].mxu0
  %133 = vdwg.mxu0
  %v134 = vld [vmem:[%s2] sm:$0xf]
  %v136 = vsel %vm55, %v134, 0
  %138 = vmatprep.subr.mxu0 0.0
  %139 = vmatpush1.msra.mxu0 %v136
  %140 = vmatprep.subr.mxu0 0.0
  %141 = vmatpush1.msra.mxu0 0.0
  %142 = vmatprep.subr.mxu0 0.0
  %143 = vmatpush1.msra.mxu0 0.0
  %144 = vmatprep.subr.mxu0 0.0
  %145 = vmatpush1.msra.mxu0 0.0
  %146 = vmatprep.subr.mxu0 0.0
  %147 = vmatpush1.msra.mxu0 0.0
  %148 = vmatprep.subr.mxu0 0.0
  %149 = vmatpush1.msra.mxu0 0.0
  %150 = vmatprep.subr.mxu0 0.0
  %151 = vmatpush1.msra.mxu0 0.0
  %152 = vmatprep.subr.mxu0 0.0
  %153 = vmatpush1.msra.mxu0 0.0
  %154 = vmatprep.subr.mxu0 0.0
  %155 = vmatpush1.msra.mxu0 0.0
  %156 = vmatprep.subr.mxu0 0.0
  %157 = vmatpush1.msra.mxu0 0.0
  %158 = vmatprep.subr.mxu0 0.0
  %159 = vmatpush1.msra.mxu0 0.0
  %160 = vmatprep.subr.mxu0 0.0
  %161 = vmatpush1.msra.mxu0 0.0
  %162 = vmatprep.subr.mxu0 0.0
  %163 = vmatpush1.msra.mxu0 0.0
  %164 = vmatprep.subr.mxu0 0.0
  %165 = vmatpush1.msra.mxu0 0.0
  %166 = vmatprep.subr.mxu0 0.0
  %167 = vmatpush1.msra.mxu0 0.0
  %168 = vmatprep.subr.mxu0 0.0
  %169 = vmatpush1.msra.mxu0 0.0
  %170 = vmatprep.subr.mxu0 0.0
  %171 = vmatpush1.msra.mxu0 0.0
  %172 = vmatprep.subr.mxu0 0.0
  %173 = vmatpush1.msra.mxu0 0.0
  %174 = vmatprep.subr.mxu0 0.0
  %175 = vmatpush1.msra.mxu0 0.0
  %176 = vmatprep.subr.mxu0 0.0
  %177 = vmatpush1.msra.mxu0 0.0
  %178 = vmatprep.subr.mxu0 0.0
  %179 = vmatpush1.msra.mxu0 0.0
  %180 = vmatprep.subr.mxu0 0.0
  %181 = vmatpush1.msra.mxu0 0.0
  %182 = vmatprep.subr.mxu0 0.0
  %183 = vmatpush1.msra.mxu0 0.0
  %184 = vmatprep.subr.mxu0 0.0
  %185 = vmatpush1.msra.mxu0 0.0
  %186 = vmatprep.subr.mxu0 0.0
  %187 = vmatpush1.msra.mxu0 0.0
  %188 = vmatprep.subr.mxu0 0.0
  %189 = vmatpush1.msra.mxu0 0.0
  %190 = vmatprep.subr.mxu0 0.0
  %191 = vmatpush1.msra.mxu0 0.0
  %192 = vmatprep.subr.mxu0 0.0
  %193 = vmatpush1.msra.mxu0 0.0
  %194 = vmatprep.subr.mxu0 0.0
  %195 = vmatpush1.msra.mxu0 0.0
  %196 = vmatprep.subr.mxu0 0.0
  %197 = vmatpush1.msra.mxu0 0.0
  %198 = vmatprep.subr.mxu0 0.0
  %199 = vmatpush1.msra.mxu0 0.0
  %200 = vmatprep.subr.mxu0 0.0
  %201 = vmatpush1.msra.mxu0 0.0
  %202 = vmatprep.mubr.f32.mxu0 0.0
  %203 = vmatmul.mubr.f32.gmra.mrb[0].mxu0 %v50
  %v204 = vpop.f32.mrb[0].mxu0
  %v205 = vadd.f32 0.0, %v204
  %v206 = vpop.f32.mrb[0].mxu0
  %207 = vmatprep.mubr.f32.mxu0 0.0
  %208 = vmatmul.mubr.f32.gmra.mrb[0].mxu0 %v53
  %v209 = vpop.f32.mrb[0].mxu0
  %v210 = vadd.f32 0.0, %v209
  %v211 = vpop.f32.mrb[0].mxu0
  %212 = vdwg.mxu0
  %v215 = vcombine.high %v126, %v126
  %v217 = vunpack.c.l.s4 1966171168
  %v218 = vunpack.c.0.s8 %v217
  %v219 = vlaneseq
  %v220 = vshrl.u32 %v219, 7
  %v221 = vsub.s32 %v218, %v220
  %v222 = vrot.slane %v126, %v221
  %v224 = vunpack.c.l.s4 1966171168
  %v225 = vunpack.c.0.s8 %v224
  %v226 = vlaneseq
  %v227 = vshrl.u32 %v226, 7
  %v228 = vsub.s32 %v225, %v227
  %v229 = vrot.slane %v215, %v228
  %v230 = vcombine.high %v222, %v222
  %v231 = vcombine.high %v229, %v229
  %v233 = vunpack.c.l.s4 1966171168
  %v234 = vunpack.c.0.s8 %v233
  %v235 = vlaneseq
  %v236 = vshrl.u32 %v235, 7
  %v237 = vsub.s32 %v234, %v236
  %v238 = vrot.slane %v222, %v237
  %v240 = vunpack.c.l.s4 1966171168
  %v241 = vunpack.c.0.s8 %v240
  %v242 = vlaneseq
  %v243 = vshrl.u32 %v242, 7
  %v244 = vsub.s32 %v241, %v243
  %v245 = vrot.slane %v229, %v244
  %v247 = vunpack.c.l.s4 1966171168
  %v248 = vunpack.c.0.s8 %v247
  %v249 = vlaneseq
  %v250 = vshrl.u32 %v249, 7
  %v251 = vsub.s32 %v248, %v250
  %v252 = vrot.slane %v230, %v251
  %v254 = vunpack.c.l.s4 1966171168
  %v255 = vunpack.c.0.s8 %v254
  %v256 = vlaneseq
  %v257 = vshrl.u32 %v256, 7
  %v258 = vsub.s32 %v255, %v257
  %v259 = vrot.slane %v231, %v258
  %v260 = vcombine.high %v238, %v238
  %v261 = vcombine.high %v245, %v245
  %v262 = vcombine.high %v252, %v252
  %v263 = vcombine.high %v259, %v259
  %v264 = vcombine.high %v131, %v131
  %v266 = vunpack.c.l.s4 1966171168
  %v267 = vunpack.c.0.s8 %v266
  %v268 = vlaneseq
  %v269 = vshrl.u32 %v268, 7
  %v270 = vsub.s32 %v267, %v269
  %v271 = vrot.slane %v131, %v270
  %v273 = vunpack.c.l.s4 1966171168
  %v274 = vunpack.c.0.s8 %v273
  %v275 = vlaneseq
  %v276 = vshrl.u32 %v275, 7
  %v277 = vsub.s32 %v274, %v276
  %v278 = vrot.slane %v264, %v277
  %v279 = vcombine.high %v271, %v271
  %v280 = vcombine.high %v278, %v278
  %v282 = vunpack.c.l.s4 1966171168
  %v283 = vunpack.c.0.s8 %v282
  %v284 = vlaneseq
  %v285 = vshrl.u32 %v284, 7
  %v286 = vsub.s32 %v283, %v285
  %v287 = vrot.slane %v271, %v286
  %v289 = vunpack.c.l.s4 1966171168
  %v290 = vunpack.c.0.s8 %v289
  %v291 = vlaneseq
  %v292 = vshrl.u32 %v291, 7
  %v293 = vsub.s32 %v290, %v292
  %v294 = vrot.slane %v278, %v293
  %v296 = vunpack.c.l.s4 1966171168
  %v297 = vunpack.c.0.s8 %v296
  %v298 = vlaneseq
  %v299 = vshrl.u32 %v298, 7
  %v300 = vsub.s32 %v297, %v299
  %v301 = vrot.slane %v279, %v300
  %v303 = vunpack.c.l.s4 1966171168
  %v304 = vunpack.c.0.s8 %v303
  %v305 = vlaneseq
  %v306 = vshrl.u32 %v305, 7
  %v307 = vsub.s32 %v304, %v306
  %v308 = vrot.slane %v280, %v307
  %v309 = vcombine.high %v287, %v287
  %v310 = vcombine.high %v294, %v294
  %v311 = vcombine.high %v301, %v301
  %v312 = vcombine.high %v308, %v308
  %v313 = vlaneseq
  %v314 = vshrl.u32 %v313, 7
  %v315 = vsub.s32 0, %v314
  %v316 = vrot.slane %v238, %v315
  %v317 = vlaneseq
  %v318 = vshrl.u32 %v317, 7
  %v319 = vsub.s32 0, %v318
  %v320 = vrot.slane %v252, %v319
  %v321 = vlaneseq
  %v322 = vshrl.u32 %v321, 7
  %v323 = vsub.s32 0, %v322
  %v324 = vrot.slane %v260, %v323
  %v325 = vlaneseq
  %v326 = vshrl.u32 %v325, 7
  %v327 = vsub.s32 0, %v326
  %v328 = vrot.slane %v262, %v327
  %v329 = vlaneseq
  %v330 = vshrl.u32 %v329, 7
  %v331 = vsub.s32 0, %v330
  %v332 = vrot.slane %v245, %v331
  %v333 = vlaneseq
  %v334 = vshrl.u32 %v333, 7
  %v335 = vsub.s32 0, %v334
  %v336 = vrot.slane %v259, %v335
  %v337 = vlaneseq
  %v338 = vshrl.u32 %v337, 7
  %v339 = vsub.s32 0, %v338
  %v340 = vrot.slane %v261, %v339
  %v341 = vlaneseq
  %v342 = vshrl.u32 %v341, 7
  %v343 = vsub.s32 0, %v342
  %v344 = vrot.slane %v263, %v343
  %v345 = vlaneseq
  %v346 = vshrl.u32 %v345, 7
  %v347 = vsub.s32 0, %v346
  %v348 = vrot.slane %v287, %v347
  %v349 = vlaneseq
  %v350 = vshrl.u32 %v349, 7
  %v351 = vsub.s32 0, %v350
  %v352 = vrot.slane %v301, %v351
  %v353 = vlaneseq
  %v354 = vshrl.u32 %v353, 7
  %v355 = vsub.s32 0, %v354
  %v356 = vrot.slane %v309, %v355
  %v357 = vlaneseq
  %v358 = vshrl.u32 %v357, 7
  %v359 = vsub.s32 0, %v358
  %v360 = vrot.slane %v311, %v359
  %v361 = vlaneseq
  %v362 = vshrl.u32 %v361, 7
  %v363 = vsub.s32 0, %v362
  %v364 = vrot.slane %v294, %v363
  %v365 = vlaneseq
  %v366 = vshrl.u32 %v365, 7
  %v367 = vsub.s32 0, %v366
  %v368 = vrot.slane %v308, %v367
  %v369 = vlaneseq
  %v370 = vshrl.u32 %v369, 7
  %v371 = vsub.s32 0, %v370
  %v372 = vrot.slane %v310, %v371
  %v373 = vlaneseq
  %v374 = vshrl.u32 %v373, 7
  %v375 = vsub.s32 0, %v374
  %v376 = vrot.slane %v312, %v375
  %v393 = vadd.f32 %v316, %v205
  %v394 = vadd.f32 %v320, %v205
  %v395 = vadd.f32 %v324, %v205
  %v396 = vadd.f32 %v328, %v205
  %v397 = vadd.f32 %v332, %v205
  %v398 = vadd.f32 %v336, %v205
  %v399 = vadd.f32 %v340, %v205
  %v400 = vadd.f32 %v344, %v205
  %v401 = vadd.f32 %v348, %v210
  %v402 = vadd.f32 %v352, %v210
  %v403 = vadd.f32 %v356, %v210
  %v404 = vadd.f32 %v360, %v210
  %v405 = vadd.f32 %v364, %v210
  %v406 = vadd.f32 %v368, %v210
  %v407 = vadd.f32 %v372, %v210
  %v408 = vadd.f32 %v376, %v210
  %v409 = vmul.f32 %v393, 0.2
  %v410 = vmul.f32 %v394, 0.2
  %v411 = vmul.f32 %v395, 0.2
  %v412 = vmul.f32 %v396, 0.2
  %v413 = vmul.f32 %v397, 0.2
  %v414 = vmul.f32 %v398, 0.2
  %v415 = vmul.f32 %v399, 0.2
  %v416 = vmul.f32 %v400, 0.2
  %v417 = vmul.f32 %v401, 0.2
  %v418 = vmul.f32 %v402, 0.2
  %v419 = vmul.f32 %v403, 0.2
  %v420 = vmul.f32 %v404, 0.2
  %v421 = vmul.f32 %v405, 0.2
  %v422 = vmul.f32 %v406, 0.2
  %v423 = vmul.f32 %v407, 0.2
  %v424 = vmul.f32 %v408, 0.2
  %v425 = vmax.f32 %v393, %v409
  %v426 = vmax.f32 %v394, %v410
  %v427 = vmax.f32 %v395, %v411
  %v428 = vmax.f32 %v396, %v412
  %v429 = vmax.f32 %v397, %v413
  %v430 = vmax.f32 %v398, %v414
  %v431 = vmax.f32 %v399, %v415
  %v432 = vmax.f32 %v400, %v416
  %v433 = vmax.f32 %v401, %v417
  %v434 = vmax.f32 %v402, %v418
  %v435 = vmax.f32 %v403, %v419
  %v436 = vmax.f32 %v404, %v420
  %v437 = vmax.f32 %v405, %v421
  %v438 = vmax.f32 %v406, %v422
  %v439 = vmax.f32 %v407, %v423
  %v440 = vmax.f32 %v408, %v424
  %v441 = vld [vmem:[%s4] sm:$0xff]
  %v442 = vld [vmem:[%s4 + $0x8] sm:$0xff]
  %v443 = vld [vmem:[%s4 + $0x10] sm:$0xff]
  %v444 = vld [vmem:[%s4 + $0x18] sm:$0xff]
  %v445 = vld [vmem:[%s5] sm:$0x1]
  %v447 = vlaneseq
  %v448 = vshrl.u32 %v447, 7
  %v449 = vsub.s32 0, %v448
  %v450 = vrot.slane %v445, %v449
  %vm452 = vcmask 261120
  %v454 = vsel %vm452, %v425, 0
  %v457 = vsel %vm452, %v426, 0
  %v460 = vsel %vm452, %v427, 0
  %v463 = vsel %vm452, %v428, 0
  %v466 = vsel %vm452, %v429, 0
  %v469 = vsel %vm452, %v430, 0
  %v472 = vsel %vm452, %v431, 0
  %v475 = vsel %vm452, %v432, 0
  %v478 = vsel %vm452, %v433, 0
  %v481 = vsel %vm452, %v434, 0
  %v484 = vsel %vm452, %v435, 0
  %v487 = vsel %vm452, %v436, 0
  %v490 = vsel %vm452, %v437, 0
  %v493 = vsel %vm452, %v438, 0
  %v496 = vsel %vm452, %v439, 0
  %v499 = vsel %vm452, %v440, 0
  %501 = vmatprep.subr.mxu0 0.0
  %502 = vmatpush1.msra.mxu0 %v441
  %503 = vmatprep.subr.mxu0 0.0
  %504 = vmatpush1.msra.mxu0 %v442
  %505 = vmatprep.subr.mxu0 0.0
  %506 = vmatpush1.msra.mxu0 %v443
  %507 = vmatprep.subr.mxu0 0.0
  %508 = vmatpush1.msra.mxu0 %v444
  %509 = vmatprep.subr.mxu0 0.0
  %510 = vmatpush1.msra.mxu0 0.0
  %511 = vmatprep.subr.mxu0 0.0
  %512 = vmatpush1.msra.mxu0 0.0
  %513 = vmatprep.subr.mxu0 0.0
  %514 = vmatpush1.msra.mxu0 0.0
  %515 = vmatprep.subr.mxu0 0.0
  %516 = vmatpush1.msra.mxu0 0.0
  %517 = vmatprep.subr.mxu0 0.0
  %518 = vmatpush1.msra.mxu0 0.0
  %519 = vmatprep.subr.mxu0 0.0
  %520 = vmatpush1.msra.mxu0 0.0
  %521 = vmatprep.subr.mxu0 0.0
  %522 = vmatpush1.msra.mxu0 0.0
  %523 = vmatprep.subr.mxu0 0.0
  %524 = vmatpush1.msra.mxu0 0.0
  %525 = vmatprep.subr.mxu0 0.0
  %526 = vmatpush1.msra.mxu0 0.0
  %527 = vmatprep.subr.mxu0 0.0
  %528 = vmatpush1.msra.mxu0 0.0
  %529 = vmatprep.subr.mxu0 0.0
  %530 = vmatpush1.msra.mxu0 0.0
  %531 = vmatprep.subr.mxu0 0.0
  %532 = vmatpush1.msra.mxu0 0.0
  %533 = vmatprep.subr.mxu0 0.0
  %534 = vmatpush1.msra.mxu0 0.0
  %535 = vmatprep.subr.mxu0 0.0
  %536 = vmatpush1.msra.mxu0 0.0
  %537 = vmatprep.subr.mxu0 0.0
  %538 = vmatpush1.msra.mxu0 0.0
  %539 = vmatprep.subr.mxu0 0.0
  %540 = vmatpush1.msra.mxu0 0.0
  %541 = vmatprep.subr.mxu0 0.0
  %542 = vmatpush1.msra.mxu0 0.0
  %543 = vmatprep.subr.mxu0 0.0
  %544 = vmatpush1.msra.mxu0 0.0
  %545 = vmatprep.subr.mxu0 0.0
  %546 = vmatpush1.msra.mxu0 0.0
  %547 = vmatprep.subr.mxu0 0.0
  %548 = vmatpush1.msra.mxu0 0.0
  %549 = vmatprep.subr.mxu0 0.0
  %550 = vmatpush1.msra.mxu0 0.0
  %551 = vmatprep.subr.mxu0 0.0
  %552 = vmatpush1.msra.mxu0 0.0
  %553 = vmatprep.subr.mxu0 0.0
  %554 = vmatpush1.msra.mxu0 0.0
  %555 = vmatprep.subr.mxu0 0.0
  %556 = vmatpush1.msra.mxu0 0.0
  %557 = vmatprep.subr.mxu0 0.0
  %558 = vmatpush1.msra.mxu0 0.0
  %559 = vmatprep.subr.mxu0 0.0
  %560 = vmatpush1.msra.mxu0 0.0
  %561 = vmatprep.subr.mxu0 0.0
  %562 = vmatpush1.msra.mxu0 0.0
  %563 = vmatprep.subr.mxu0 0.0
  %564 = vmatpush1.msra.mxu0 0.0
  %565 = vmatprep.mubr.f32.mxu0 0.0
  %566 = vmatmul.mubr.f32.gmra.mrb[0].mxu0 %v454
  %v567 = vpop.f32.mrb[0].mxu0
  %v568 = vadd.f32 %v450, %v567
  %v569 = vpop.f32.mrb[0].mxu0
  %570 = vmatprep.mubr.f32.mxu0 0.0
  %571 = vmatmul.mubr.f32.gmra.mrb[0].mxu0 %v457
  %v572 = vpop.f32.mrb[0].mxu0
  %v573 = vadd.f32 %v450, %v572
  %v574 = vpop.f32.mrb[0].mxu0
  %575 = vmatprep.mubr.f32.mxu0 0.0
  %576 = vmatmul.mubr.f32.gmra.mrb[0].mxu0 %v460
  %v577 = vpop.f32.mrb[0].mxu0
  %v578 = vadd.f32 %v450, %v577
  %v579 = vpop.f32.mrb[0].mxu0
  %580 = vmatprep.mubr.f32.mxu0 0.0
  %581 = vmatmul.mubr.f32.gmra.mrb[0].mxu0 %v463
  %v582 = vpop.f32.mrb[0].mxu0
  %v583 = vadd.f32 %v450, %v582
  %v584 = vpop.f32.mrb[0].mxu0
  %585 = vmatprep.mubr.f32.mxu0 0.0
  %586 = vmatmul.mubr.f32.gmra.mrb[0].mxu0 %v466
  %v587 = vpop.f32.mrb[0].mxu0
  %v588 = vadd.f32 %v450, %v587
  %v589 = vpop.f32.mrb[0].mxu0
  %590 = vmatprep.mubr.f32.mxu0 0.0
  %591 = vmatmul.mubr.f32.gmra.mrb[0].mxu0 %v469
  %v592 = vpop.f32.mrb[0].mxu0
  %v593 = vadd.f32 %v450, %v592
  %v594 = vpop.f32.mrb[0].mxu0
  %595 = vmatprep.mubr.f32.mxu0 0.0
  %596 = vmatmul.mubr.f32.gmra.mrb[0].mxu0 %v472
  %v597 = vpop.f32.mrb[0].mxu0
  %v598 = vadd.f32 %v450, %v597
  %v599 = vpop.f32.mrb[0].mxu0
  %600 = vmatprep.mubr.f32.mxu0 0.0
  %601 = vmatmul.mubr.f32.gmra.mrb[0].mxu0 %v475
  %v602 = vpop.f32.mrb[0].mxu0
  %v603 = vadd.f32 %v450, %v602
  %v604 = vpop.f32.mrb[0].mxu0
  %605 = vmatprep.mubr.f32.mxu0 0.0
  %606 = vmatmul.mubr.f32.gmra.mrb[0].mxu0 %v478
  %v607 = vpop.f32.mrb[0].mxu0
  %v608 = vadd.f32 %v450, %v607
  %v609 = vpop.f32.mrb[0].mxu0
  %610 = vmatprep.mubr.f32.mxu0 0.0
  %611 = vmatmul.mubr.f32.gmra.mrb[0].mxu0 %v481
  %v612 = vpop.f32.mrb[0].mxu0
  %v613 = vadd.f32 %v450, %v612
  %v614 = vpop.f32.mrb[0].mxu0
  %615 = vmatprep.mubr.f32.mxu0 0.0
  %616 = vmatmul.mubr.f32.gmra.mrb[0].mxu0 %v484
  %v617 = vpop.f32.mrb[0].mxu0
  %v618 = vadd.f32 %v450, %v617
  %v619 = vpop.f32.mrb[0].mxu0
  %620 = vmatprep.mubr.f32.mxu0 0.0
  %621 = vmatmul.mubr.f32.gmra.mrb[0].mxu0 %v487
  %v622 = vpop.f32.mrb[0].mxu0
  %v623 = vadd.f32 %v450, %v622
  %v624 = vpop.f32.mrb[0].mxu0
  %625 = vmatprep.mubr.f32.mxu0 0.0
  %626 = vmatmul.mubr.f32.gmra.mrb[0].mxu0 %v490
  %v627 = vpop.f32.mrb[0].mxu0
  %v628 = vadd.f32 %v450, %v627
  %v629 = vpop.f32.mrb[0].mxu0
  %630 = vmatprep.mubr.f32.mxu0 0.0
  %631 = vmatmul.mubr.f32.gmra.mrb[0].mxu0 %v493
  %v632 = vpop.f32.mrb[0].mxu0
  %v633 = vadd.f32 %v450, %v632
  %v634 = vpop.f32.mrb[0].mxu0
  %635 = vmatprep.mubr.f32.mxu0 0.0
  %636 = vmatmul.mubr.f32.gmra.mrb[0].mxu0 %v496
  %v637 = vpop.f32.mrb[0].mxu0
  %v638 = vadd.f32 %v450, %v637
  %v639 = vpop.f32.mrb[0].mxu0
  %640 = vmatprep.mubr.f32.mxu0 0.0
  %641 = vmatmul.mubr.f32.gmra.mrb[0].mxu0 %v499
  %v642 = vpop.f32.mrb[0].mxu0
  %v643 = vadd.f32 %v450, %v642
  %v644 = vpop.f32.mrb[0].mxu0
  %645 = vdwg.mxu0
  %v646 = vmul.f32 %v568, 0.2
  %v647 = vmul.f32 %v573, 0.2
  %v648 = vmul.f32 %v578, 0.2
  %v649 = vmul.f32 %v583, 0.2
  %v650 = vmul.f32 %v588, 0.2
  %v651 = vmul.f32 %v593, 0.2
  %v652 = vmul.f32 %v598, 0.2
  %v653 = vmul.f32 %v603, 0.2
  %v654 = vmul.f32 %v608, 0.2
  %v655 = vmul.f32 %v613, 0.2
  %v656 = vmul.f32 %v618, 0.2
  %v657 = vmul.f32 %v623, 0.2
  %v658 = vmul.f32 %v628, 0.2
  %v659 = vmul.f32 %v633, 0.2
  %v660 = vmul.f32 %v638, 0.2
  %v661 = vmul.f32 %v643, 0.2
  %v662 = vmax.f32 %v568, %v646
  %v663 = vmax.f32 %v573, %v647
  %v664 = vmax.f32 %v578, %v648
  %v665 = vmax.f32 %v583, %v649
  %v666 = vmax.f32 %v588, %v650
  %v667 = vmax.f32 %v593, %v651
  %v668 = vmax.f32 %v598, %v652
  %v669 = vmax.f32 %v603, %v653
  %v670 = vmax.f32 %v608, %v654
  %v671 = vmax.f32 %v613, %v655
  %v672 = vmax.f32 %v618, %v656
  %v673 = vmax.f32 %v623, %v657
  %v674 = vmax.f32 %v628, %v658
  %v675 = vmax.f32 %v633, %v659
  %v676 = vmax.f32 %v638, %v660
  %v677 = vmax.f32 %v643, %v661
  %vm678 = vcmask 130048
  %v679 = vsel %vm678, %v662, 0.0
  %v680 = vrot.slane %v679, 4
  %v681 = vadd.f32 %v679, %v680
  %v682 = vrot.slane %v681, 2
  %v683 = vadd.f32 %v681, %v682
  %v684 = vrot.slane %v683, 1
  %v685 = vadd.f32 %v683, %v684
  %v686 = vsel %vm678, %v663, 0.0
  %v687 = vrot.slane %v686, 4
  %v688 = vadd.f32 %v686, %v687
  %v689 = vrot.slane %v688, 2
  %v690 = vadd.f32 %v688, %v689
  %v691 = vrot.slane %v690, 1
  %v692 = vadd.f32 %v690, %v691
  %v693 = vsel %vm678, %v664, 0.0
  %v694 = vrot.slane %v693, 4
  %v695 = vadd.f32 %v693, %v694
  %v696 = vrot.slane %v695, 2
  %v697 = vadd.f32 %v695, %v696
  %v698 = vrot.slane %v697, 1
  %v699 = vadd.f32 %v697, %v698
  %v700 = vsel %vm678, %v665, 0.0
  %v701 = vrot.slane %v700, 4
  %v702 = vadd.f32 %v700, %v701
  %v703 = vrot.slane %v702, 2
  %v704 = vadd.f32 %v702, %v703
  %v705 = vrot.slane %v704, 1
  %v706 = vadd.f32 %v704, %v705
  %v707 = vsel %vm678, %v666, 0.0
  %v708 = vrot.slane %v707, 4
  %v709 = vadd.f32 %v707, %v708
  %v710 = vrot.slane %v709, 2
  %v711 = vadd.f32 %v709, %v710
  %v712 = vrot.slane %v711, 1
  %v713 = vadd.f32 %v711, %v712
  %v714 = vsel %vm678, %v667, 0.0
  %v715 = vrot.slane %v714, 4
  %v716 = vadd.f32 %v714, %v715
  %v717 = vrot.slane %v716, 2
  %v718 = vadd.f32 %v716, %v717
  %v719 = vrot.slane %v718, 1
  %v720 = vadd.f32 %v718, %v719
  %v721 = vsel %vm678, %v668, 0.0
  %v722 = vrot.slane %v721, 4
  %v723 = vadd.f32 %v721, %v722
  %v724 = vrot.slane %v723, 2
  %v725 = vadd.f32 %v723, %v724
  %v726 = vrot.slane %v725, 1
  %v727 = vadd.f32 %v725, %v726
  %v728 = vsel %vm678, %v669, 0.0
  %v729 = vrot.slane %v728, 4
  %v730 = vadd.f32 %v728, %v729
  %v731 = vrot.slane %v730, 2
  %v732 = vadd.f32 %v730, %v731
  %v733 = vrot.slane %v732, 1
  %v734 = vadd.f32 %v732, %v733
  %v735 = vsel %vm678, %v670, 0.0
  %v736 = vrot.slane %v735, 4
  %v737 = vadd.f32 %v735, %v736
  %v738 = vrot.slane %v737, 2
  %v739 = vadd.f32 %v737, %v738
  %v740 = vrot.slane %v739, 1
  %v741 = vadd.f32 %v739, %v740
  %v742 = vsel %vm678, %v671, 0.0
  %v743 = vrot.slane %v742, 4
  %v744 = vadd.f32 %v742, %v743
  %v745 = vrot.slane %v744, 2
  %v746 = vadd.f32 %v744, %v745
  %v747 = vrot.slane %v746, 1
  %v748 = vadd.f32 %v746, %v747
  %v749 = vsel %vm678, %v672, 0.0
  %v750 = vrot.slane %v749, 4
  %v751 = vadd.f32 %v749, %v750
  %v752 = vrot.slane %v751, 2
  %v753 = vadd.f32 %v751, %v752
  %v754 = vrot.slane %v753, 1
  %v755 = vadd.f32 %v753, %v754
  %v756 = vsel %vm678, %v673, 0.0
  %v757 = vrot.slane %v756, 4
  %v758 = vadd.f32 %v756, %v757
  %v759 = vrot.slane %v758, 2
  %v760 = vadd.f32 %v758, %v759
  %v761 = vrot.slane %v760, 1
  %v762 = vadd.f32 %v760, %v761
  %v763 = vsel %vm678, %v674, 0.0
  %v764 = vrot.slane %v763, 4
  %v765 = vadd.f32 %v763, %v764
  %v766 = vrot.slane %v765, 2
  %v767 = vadd.f32 %v765, %v766
  %v768 = vrot.slane %v767, 1
  %v769 = vadd.f32 %v767, %v768
  %v770 = vsel %vm678, %v675, 0.0
  %v771 = vrot.slane %v770, 4
  %v772 = vadd.f32 %v770, %v771
  %v773 = vrot.slane %v772, 2
  %v774 = vadd.f32 %v772, %v773
  %v775 = vrot.slane %v774, 1
  %v776 = vadd.f32 %v774, %v775
  %v777 = vsel %vm678, %v676, 0.0
  %v778 = vrot.slane %v777, 4
  %v779 = vadd.f32 %v777, %v778
  %v780 = vrot.slane %v779, 2
  %v781 = vadd.f32 %v779, %v780
  %v782 = vrot.slane %v781, 1
  %v783 = vadd.f32 %v781, %v782
  %v784 = vsel %vm678, %v677, 0.0
  %v785 = vrot.slane %v784, 4
  %v786 = vadd.f32 %v784, %v785
  %v787 = vrot.slane %v786, 2
  %v788 = vadd.f32 %v786, %v787
  %v789 = vrot.slane %v788, 1
  %v790 = vadd.f32 %v788, %v789
  %v791 = vld [vmem:[%s6] sm:$0xff]
  %v792 = vld [vmem:[%s6 + $0x8] sm:$0xff]
  %v793 = vld [vmem:[%s7] sm:$0xf]
  %v795 = vsel %vm55, %v793, 0
  %797 = vmatprep.subr.mxu0 0.0
  %798 = vmatpush1.msra.mxu0 %v795
  %799 = vmatprep.subr.mxu0 0.0
  %800 = vmatpush1.msra.mxu0 0.0
  %801 = vmatprep.subr.mxu0 0.0
  %802 = vmatpush1.msra.mxu0 0.0
  %803 = vmatprep.subr.mxu0 0.0
  %804 = vmatpush1.msra.mxu0 0.0
  %805 = vmatprep.subr.mxu0 0.0
  %806 = vmatpush1.msra.mxu0 0.0
  %807 = vmatprep.subr.mxu0 0.0
  %808 = vmatpush1.msra.mxu0 0.0
  %809 = vmatprep.subr.mxu0 0.0
  %810 = vmatpush1.msra.mxu0 0.0
  %811 = vmatprep.subr.mxu0 0.0
  %812 = vmatpush1.msra.mxu0 0.0
  %813 = vmatprep.subr.mxu0 0.0
  %814 = vmatpush1.msra.mxu0 0.0
  %815 = vmatprep.subr.mxu0 0.0
  %816 = vmatpush1.msra.mxu0 0.0
  %817 = vmatprep.subr.mxu0 0.0
  %818 = vmatpush1.msra.mxu0 0.0
  %819 = vmatprep.subr.mxu0 0.0
  %820 = vmatpush1.msra.mxu0 0.0
  %821 = vmatprep.subr.mxu0 0.0
  %822 = vmatpush1.msra.mxu0 0.0
  %823 = vmatprep.subr.mxu0 0.0
  %824 = vmatpush1.msra.mxu0 0.0
  %825 = vmatprep.subr.mxu0 0.0
  %826 = vmatpush1.msra.mxu0 0.0
  %827 = vmatprep.subr.mxu0 0.0
  %828 = vmatpush1.msra.mxu0 0.0
  %829 = vmatprep.subr.mxu0 0.0
  %830 = vmatpush1.msra.mxu0 0.0
  %831 = vmatprep.subr.mxu0 0.0
  %832 = vmatpush1.msra.mxu0 0.0
  %833 = vmatprep.subr.mxu0 0.0
  %834 = vmatpush1.msra.mxu0 0.0
  %835 = vmatprep.subr.mxu0 0.0
  %836 = vmatpush1.msra.mxu0 0.0
  %837 = vmatprep.subr.mxu0 0.0
  %838 = vmatpush1.msra.mxu0 0.0
  %839 = vmatprep.subr.mxu0 0.0
  %840 = vmatpush1.msra.mxu0 0.0
  %841 = vmatprep.subr.mxu0 0.0
  %842 = vmatpush1.msra.mxu0 0.0
  %843 = vmatprep.subr.mxu0 0.0
  %844 = vmatpush1.msra.mxu0 0.0
  %845 = vmatprep.subr.mxu0 0.0
  %846 = vmatpush1.msra.mxu0 0.0
  %847 = vmatprep.subr.mxu0 0.0
  %848 = vmatpush1.msra.mxu0 0.0
  %849 = vmatprep.subr.mxu0 0.0
  %850 = vmatpush1.msra.mxu0 0.0
  %851 = vmatprep.subr.mxu0 0.0
  %852 = vmatpush1.msra.mxu0 0.0
  %853 = vmatprep.subr.mxu0 0.0
  %854 = vmatpush1.msra.mxu0 0.0
  %855 = vmatprep.subr.mxu0 0.0
  %856 = vmatpush1.msra.mxu0 0.0
  %857 = vmatprep.subr.mxu0 0.0
  %858 = vmatpush1.msra.mxu0 0.0
  %859 = vmatprep.subr.mxu0 0.0
  %860 = vmatpush1.msra.mxu0 0.0
  %861 = vmatprep.mubr.f32.mxu0 0.0
  %862 = vmatmul.mubr.f32.gmra.mrb[0].mxu0 %v50
  %v863 = vpop.f32.mrb[0].mxu0
  %v864 = vadd.f32 0.0, %v863
  %v865 = vpop.f32.mrb[0].mxu0
  %866 = vmatprep.mubr.f32.mxu0 0.0
  %867 = vmatmul.mubr.f32.gmra.mrb[0].mxu0 %v53
  %v868 = vpop.f32.mrb[0].mxu0
  %v869 = vadd.f32 0.0, %v868
  %v870 = vpop.f32.mrb[0].mxu0
  %871 = vdwg.mxu0
  %vm888 = vcmask 1041409
  %v889 = vsel %vm888, %v692, %v685
  %vm890 = vcmask 1042434
  %v891 = vsel %vm890, %v699, %v889
  %vm892 = vcmask 1043459
  %v893 = vsel %vm892, %v706, %v891
  %vm894 = vcmask 1044484
  %v895 = vsel %vm894, %v713, %v893
  %vm896 = vcmask 1045509
  %v897 = vsel %vm896, %v720, %v895
  %vm898 = vcmask 1046534
  %v899 = vsel %vm898, %v727, %v897
  %vm900 = vcmask 1047559
  %v901 = vsel %vm900, %v734, %v899
  %v902 = vsel %vm888, %v748, %v741
  %v903 = vsel %vm890, %v755, %v902
  %v904 = vsel %vm892, %v762, %v903
  %v905 = vsel %vm894, %v769, %v904
  %v906 = vsel %vm896, %v776, %v905
  %v907 = vsel %vm898, %v783, %v906
  %v908 = vsel %vm900, %v790, %v907
  %v909 = vsel %vm678, %v901, 0
  %v911 = vsel %vm678, %v908, 0
  %913 = vmatprep.subr.mxu0 0.0
  %914 = vmatpush1.msra.mxu0 %v791
  %915 = vmatprep.subr.mxu0 0.0
  %916 = vmatpush1.msra.mxu0 %v792
  %917 = vmatprep.subr.mxu0 0.0
  %918 = vmatpush1.msra.mxu0 0.0
  %919 = vmatprep.subr.mxu0 0.0
  %920 = vmatpush1.msra.mxu0 0.0
  %921 = vmatprep.subr.mxu0 0.0
  %922 = vmatpush1.msra.mxu0 0.0
  %923 = vmatprep.subr.mxu0 0.0
  %924 = vmatpush1.msra.mxu0 0.0
  %925 = vmatprep.subr.mxu0 0.0
  %926 = vmatpush1.msra.mxu0 0.0
  %927 = vmatprep.subr.mxu0 0.0
  %928 = vmatpush1.msra.mxu0 0.0
  %929 = vmatprep.subr.mxu0 0.0
  %930 = vmatpush1.msra.mxu0 0.0
  %931 = vmatprep.subr.mxu0 0.0
  %932 = vmatpush1.msra.mxu0 0.0
  %933 = vmatprep.subr.mxu0 0.0
  %934 = vmatpush1.msra.mxu0 0.0
  %935 = vmatprep.subr.mxu0 0.0
  %936 = vmatpush1.msra.mxu0 0.0
  %937 = vmatprep.subr.mxu0 0.0
  %938 = vmatpush1.msra.mxu0 0.0
  %939 = vmatprep.subr.mxu0 0.0
  %940 = vmatpush1.msra.mxu0 0.0
  %941 = vmatprep.subr.mxu0 0.0
  %942 = vmatpush1.msra.mxu0 0.0
  %943 = vmatprep.subr.mxu0 0.0
  %944 = vmatpush1.msra.mxu0 0.0
  %945 = vmatprep.subr.mxu0 0.0
  %946 = vmatpush1.msra.mxu0 0.0
  %947 = vmatprep.subr.mxu0 0.0
  %948 = vmatpush1.msra.mxu0 0.0
  %949 = vmatprep.subr.mxu0 0.0
  %950 = vmatpush1.msra.mxu0 0.0
  %951 = vmatprep.subr.mxu0 0.0
  %952 = vmatpush1.msra.mxu0 0.0
  %953 = vmatprep.subr.mxu0 0.0
  %954 = vmatpush1.msra.mxu0 0.0
  %955 = vmatprep.subr.mxu0 0.0
  %956 = vmatpush1.msra.mxu0 0.0
  %957 = vmatprep.subr.mxu0 0.0
  %958 = vmatpush1.msra.mxu0 0.0
  %959 = vmatprep.subr.mxu0 0.0
  %960 = vmatpush1.msra.mxu0 0.0
  %961 = vmatprep.subr.mxu0 0.0
  %962 = vmatpush1.msra.mxu0 0.0
  %963 = vmatprep.subr.mxu0 0.0
  %964 = vmatpush1.msra.mxu0 0.0
  %965 = vmatprep.subr.mxu0 0.0
  %966 = vmatpush1.msra.mxu0 0.0
  %967 = vmatprep.subr.mxu0 0.0
  %968 = vmatpush1.msra.mxu0 0.0
  %969 = vmatprep.subr.mxu0 0.0
  %970 = vmatpush1.msra.mxu0 0.0
  %971 = vmatprep.subr.mxu0 0.0
  %972 = vmatpush1.msra.mxu0 0.0
  %973 = vmatprep.subr.mxu0 0.0
  %974 = vmatpush1.msra.mxu0 0.0
  %975 = vmatprep.subr.mxu0 0.0
  %976 = vmatpush1.msra.mxu0 0.0
  %977 = vmatprep.mubr.f32.mxu0 0.0
  %978 = vmatmul.mubr.f32.gmra.mrb[0].mxu0 %v909
  %v979 = vpop.f32.mrb[0].mxu0
  %v980 = vadd.f32 %v864, %v979
  %v981 = vpop.f32.mrb[0].mxu0
  %982 = vmatprep.mubr.f32.mxu0 0.0
  %983 = vmatmul.mubr.f32.gmra.mrb[0].mxu0 %v911
  %v984 = vpop.f32.mrb[0].mxu0
  %v985 = vadd.f32 %v869, %v984
  %v986 = vpop.f32.mrb[0].mxu0
  %987 = vdwg.mxu0
  %v988 = vld [vmem:[%s8] sm:$0x1]
  %v990 = vlaneseq
  %v991 = vshrl.u32 %v990, 7
  %v992 = vsub.s32 0, %v991
  %v993 = vrot.slane %v988, %v992
  %v995 = vadd.f32 %v980, %v993
  %v996 = vadd.f32 %v985, %v993
  %v997 = vmul.f32 %v995, 0.2
  %v998 = vmul.f32 %v996, 0.2
  %v999 = vmax.f32 %v995, %v997
  %v1000 = vmax.f32 %v996, %v998
  %v1001 = vld [vmem:[%s9] sm:$0xff]
  %v1002 = vld [vmem:[%s9 + $0x8] sm:$0xff]
  %v1003 = vld [vmem:[%s9 + $0x10] sm:$0xff]
  %v1004 = vld [vmem:[%s9 + $0x18] sm:$0xff]
  %v1005 = vld [vmem:[%s10] sm:$0x1]
  %v1007 = vlaneseq
  %v1008 = vshrl.u32 %v1007, 7
  %v1009 = vsub.s32 0, %v1008
  %v1010 = vrot.slane %v1005, %v1009
  %v1013 = vsel %vm452, %v999, 0
  %v1016 = vsel %vm452, %v1000, 0
  %1018 = vmatprep.subr.mxu0 0.0
  %1019 = vmatpush1.msra.mxu0 %v1001
  %1020 = vmatprep.subr.mxu0 0.0
  %1021 = vmatpush1.msra.mxu0 %v1002
  %1022 = vmatprep.subr.mxu0 0.0
  %1023 = vmatpush1.msra.mxu0 %v1003
  %1024 = vmatprep.subr.mxu0 0.0
  %1025 = vmatpush1.msra.mxu0 %v1004
  %1026 = vmatprep.subr.mxu0 0.0
  %1027 = vmatpush1.msra.mxu0 0.0
  %1028 = vmatprep.subr.mxu0 0.0
  %1029 = vmatpush1.msra.mxu0 0.0
  %1030 = vmatprep.subr.mxu0 0.0
  %1031 = vmatpush1.msra.mxu0 0.0
  %1032 = vmatprep.subr.mxu0 0.0
  %1033 = vmatpush1.msra.mxu0 0.0
  %1034 = vmatprep.subr.mxu0 0.0
  %1035 = vmatpush1.msra.mxu0 0.0
  %1036 = vmatprep.subr.mxu0 0.0
  %1037 = vmatpush1.msra.mxu0 0.0
  %1038 = vmatprep.subr.mxu0 0.0
  %1039 = vmatpush1.msra.mxu0 0.0
  %1040 = vmatprep.subr.mxu0 0.0
  %1041 = vmatpush1.msra.mxu0 0.0
  %1042 = vmatprep.subr.mxu0 0.0
  %1043 = vmatpush1.msra.mxu0 0.0
  %1044 = vmatprep.subr.mxu0 0.0
  %1045 = vmatpush1.msra.mxu0 0.0
  %1046 = vmatprep.subr.mxu0 0.0
  %1047 = vmatpush1.msra.mxu0 0.0
  %1048 = vmatprep.subr.mxu0 0.0
  %1049 = vmatpush1.msra.mxu0 0.0
  %1050 = vmatprep.subr.mxu0 0.0
  %1051 = vmatpush1.msra.mxu0 0.0
  %1052 = vmatprep.subr.mxu0 0.0
  %1053 = vmatpush1.msra.mxu0 0.0
  %1054 = vmatprep.subr.mxu0 0.0
  %1055 = vmatpush1.msra.mxu0 0.0
  %1056 = vmatprep.subr.mxu0 0.0
  %1057 = vmatpush1.msra.mxu0 0.0
  %1058 = vmatprep.subr.mxu0 0.0
  %1059 = vmatpush1.msra.mxu0 0.0
  %1060 = vmatprep.subr.mxu0 0.0
  %1061 = vmatpush1.msra.mxu0 0.0
  %1062 = vmatprep.subr.mxu0 0.0
  %1063 = vmatpush1.msra.mxu0 0.0
  %1064 = vmatprep.subr.mxu0 0.0
  %1065 = vmatpush1.msra.mxu0 0.0
  %1066 = vmatprep.subr.mxu0 0.0
  %1067 = vmatpush1.msra.mxu0 0.0
  %1068 = vmatprep.subr.mxu0 0.0
  %1069 = vmatpush1.msra.mxu0 0.0
  %1070 = vmatprep.subr.mxu0 0.0
  %1071 = vmatpush1.msra.mxu0 0.0
  %1072 = vmatprep.subr.mxu0 0.0
  %1073 = vmatpush1.msra.mxu0 0.0
  %1074 = vmatprep.subr.mxu0 0.0
  %1075 = vmatpush1.msra.mxu0 0.0
  %1076 = vmatprep.subr.mxu0 0.0
  %1077 = vmatpush1.msra.mxu0 0.0
  %1078 = vmatprep.subr.mxu0 0.0
  %1079 = vmatpush1.msra.mxu0 0.0
  %1080 = vmatprep.subr.mxu0 0.0
  %1081 = vmatpush1.msra.mxu0 0.0
  %1082 = vmatprep.mubr.f32.mxu0 0.0
  %1083 = vmatmul.mubr.f32.gmra.mrb[0].mxu0 %v1013
  %v1084 = vpop.f32.mrb[0].mxu0
  %v1085 = vadd.f32 %v1010, %v1084
  %v1086 = vpop.f32.mrb[0].mxu0
  %1087 = vmatprep.mubr.f32.mxu0 0.0
  %1088 = vmatmul.mubr.f32.gmra.mrb[0].mxu0 %v1016
  %v1089 = vpop.f32.mrb[0].mxu0
  %v1090 = vadd.f32 %v1010, %v1089
  %v1091 = vpop.f32.mrb[0].mxu0
  %1092 = vdwg.mxu0
  %vm1093 = vcmask 48128
  %1094 = vst.msk [vmem:[%s11] sm:$0xff] %vm1093, %v1085
  %1095 = vst.msk [vmem:[%s11 + $0x8] sm:$0xff] %vm1093, %v1090
  // Predicated region
  $region46: #{tpu_custom_call.1} parent=0 // pred_check
    _
  $region47: #{tpu_custom_call.1} parent=0 // pred_check_branch
    %1097 = sbr.rel (0) target = $region49
  $region48: #{tpu_custom_call.1} parent=0 // pred_region
    _
  $region49: #{tpu_custom_call.1} parent=0 // pred_fallthru
    _
  // Predicated region
  $region50: #{tpu_custom_call.1} parent=0 // pred_check
    _
  $region51: #{tpu_custom_call.1} parent=0 // pred_check_branch
    %1099 = sbr.rel (0) target = $region53
  $region52: #{tpu_custom_call.1} parent=0 // pred_region
    _
  $region53: #{tpu_custom_call.1} parent=0 // pred_fallthru
    _

</llo_original>
